<compile_context>
chip_gen: v5e
topology: v5e:2x2
jax: 0.10.0
libtpu: 0.0.40
codegen_flags: <defaults>
</compile_context>

<pallas_src>
import functools

import jax
import jax.numpy as jnp
from jax.experimental import pallas as pl
from jax.experimental.pallas import tpu as pltpu


def _linear_kernel_kloop(x_ref, w_ref, b_ref, o_ref, acc_ref):
    """Split-K path: grid (M/tm, N/tn, K/tk), f32 accumulator resident over k."""
    k = pl.program_id(2)

    @pl.when(k == 0)
    def _init():
        # Bias fused into accumulator init (broadcast across rows).
        acc_ref[...] = jnp.broadcast_to(
            b_ref[...].astype(jnp.float32), acc_ref.shape
        )

    # x: (tm, tk), w: (tn, tk) in native (outp, inp) layout -> contract dim 1
    # of both (i.e. x @ w.T) on the MXU with an f32 accumulator.
    acc_ref[...] += jax.lax.dot_general(
        x_ref[...],
        w_ref[...],
        dimension_numbers=(((1,), (1,)), ((), ())),
        preferred_element_type=jnp.float32,
    )

    @pl.when(k == pl.num_programs(2) - 1)
    def _finalize():
        o_ref[...] = acc_ref[...].astype(o_ref.dtype)


def _linear_kernel_single(x_ref, w_ref, b_ref, o_ref):
    """K fits one panel: no K grid axis, no scratch accumulator."""
    acc = jax.lax.dot_general(
        x_ref[...],
        w_ref[...],
        dimension_numbers=(((1,), (1,)), ((), ())),
        preferred_element_type=jnp.float32,
    )
    o_ref[...] = (acc + b_ref[...].astype(jnp.float32)).astype(o_ref.dtype)


def _round_up(x: int, m: int) -> int:
    return ((x + m - 1) // m) * m


def _default_tile_config():
    """(tm, tn, tk) per TPU generation (MXU-vs-HBM roofline crossover)."""
    try:
        kind = jax.devices()[0].device_kind.lower()
    except Exception:  # no devices visible at trace time
        kind = ""
    if "v6" in kind:
        # 918 TF/s bf16 vs ~1.4 TB/s HBM: needs big M/N tiles. ~16 MiB/step,
        # well inside the 32 MiB default scoped VMEM.
        return 1024, 1024, 512
    if "v5" in kind or "v4" in kind:
        # v5e: 197 TF/s vs ~0.82 TB/s; 512^2 already compute-bound and the
        # ~5 MiB/step footprint fits the 16 MiB default scoped VMEM.
        return 512, 512, 512
    # v7x (64 MiB VMEM/TC, ~3.2 TB/s HBM) and unknown chips: 768 tiles are
    # compute-bound there and use only ~10 MiB/step.
    return 768, 768, 512


@functools.partial(jax.jit, static_argnames=("tm", "tn", "tk", "compute_dtype"))
def my_linear(x, w, b, *, tm=None, tn=None, tk=None, compute_dtype=jnp.bfloat16):
    """Pallas equivalent of MyLinear.forward: y = x @ w.T + b.

    x: (..., inp), w: (outp, inp), b: (outp,). Output dtype == x.dtype.
    """
    orig_lead = x.shape[:-1]
    K = x.shape[-1]
    N, K_w = w.shape
    assert K == K_w, (K, K_w)
    out_dtype = x.dtype

    d_tm, d_tn, d_tk = _default_tile_config()
    tm = d_tm if tm is None else tm
    tn = d_tn if tn is None else tn
    tk = d_tk if tk is None else tk
    if compute_dtype is None:
        compute_dtype = x.dtype

    # Layout plumbing in the wrapper (no w.T materialization): flatten the
    # leading dims and cast MXU operands to the compute dtype (bf16).
    x2 = x.reshape(-1, K).astype(compute_dtype)
    w2 = w.astype(compute_dtype)          # native (outp, inp) layout
    b2 = b.reshape(1, N)
    M = x2.shape[0]

    # Lane/sublane-friendly tile rounding for small dims; never pad M or N
    # (Pallas masks ragged edge blocks; their garbage never reaches the out).
    tm = min(_round_up(tm, 16), _round_up(M, 16))
    tn = min(_round_up(tn, 128), _round_up(N, 128))

    if K <= tk:
        # Whole K panel fits one block (block == full dim, so no 128-multiple
        # requirement and no padding). K grid axis + accumulator disappear.
        tk = K
        Kp = K
        split_k = False
    else:
        tk = _round_up(tk, 128)
        # K is the *only* dim that must be zero padded: garbage in a ragged K
        # block would feed the reduction and corrupt real outputs.
        Kp = _round_up(K, tk)
        if Kp != K:
            x2 = jnp.pad(x2, ((0, 0), (0, Kp - K)))
            w2 = jnp.pad(w2, ((0, 0), (0, Kp - K)))
        split_k = True

    nm = pl.cdiv(M, tm)
    nn = pl.cdiv(N, tn)

    cost = pl.CostEstimate(
        flops=2 * M * N * K,
        transcendentals=0,
        bytes_accessed=(
            M * Kp * x2.dtype.itemsize
            + N * Kp * w2.dtype.itemsize
            + N * b2.dtype.itemsize
            + M * N * jnp.dtype(out_dtype).itemsize
        ),
    )

    if split_k:
        nk = Kp // tk
        out = pl.pallas_call(
            _linear_kernel_kloop,
            out_shape=jax.ShapeDtypeStruct((M, N), out_dtype),
            grid_spec=pltpu.PrefetchScalarGridSpec(
                num_scalar_prefetch=0,
                grid=(nm, nn, nk),
                in_specs=[
                    pl.BlockSpec((tm, tk), lambda i, j, k: (i, k)),   # x
                    pl.BlockSpec((tn, tk), lambda i, j, k: (j, k)),   # w (N,K)
                    pl.BlockSpec((1, tn), lambda i, j, k: (0, j)),    # bias
                ],
                out_specs=pl.BlockSpec((tm, tn), lambda i, j, k: (i, j)),
                scratch_shapes=[pltpu.VMEM((tm, tn), jnp.float32)],
            ),
            compiler_params=pltpu.CompilerParams(
                dimension_semantics=("parallel", "parallel", "arbitrary"),
            ),
            cost_estimate=cost,
        )(x2, w2, b2)
    else:
        out = pl.pallas_call(
            _linear_kernel_single,
            out_shape=jax.ShapeDtypeStruct((M, N), out_dtype),
            grid_spec=pltpu.PrefetchScalarGridSpec(
                num_scalar_prefetch=0,
                grid=(nm, nn),
                in_specs=[
                    pl.BlockSpec((tm, tk), lambda i, j: (i, 0)),      # x
                    pl.BlockSpec((tn, tk), lambda i, j: (j, 0)),      # w (N,K)
                    pl.BlockSpec((1, tn), lambda i, j: (0, j)),       # bias
                ],
                out_specs=pl.BlockSpec((tm, tn), lambda i, j: (i, j)),
            ),
            compiler_params=pltpu.CompilerParams(
                dimension_semantics=("parallel", "parallel"),
            ),
            cost_estimate=cost,
        )(x2, w2, b2)

    return out.reshape(*orig_lead, N)


if __name__ == "__main__":
    key = jax.random.PRNGKey(0)
    kx, kw, kb = jax.random.split(key, 3)

    # MyLinear(inp=32, outp=64), batch=2 — matches the PyTorch module spec.
    batch, inp, outp = 2, 32, 64
    x = jax.random.normal(kx, (batch, inp), dtype=jnp.float32)
    w = jax.random.normal(kw, (outp, inp), dtype=jnp.float32)
    b = jax.random.normal(kb, (outp,), dtype=jnp.float32)

    out = jax.block_until_ready(my_linear(x, w, b))
    ref = x @ w.T + b
    assert out.shape == (batch, outp), out.shape
    assert out.dtype == x.dtype, out.dtype
    # bf16 MXU inputs + f32 accumulation vs pure-f32 reference.
    assert jnp.allclose(out, ref, atol=1e-1, rtol=2e-2), float(
        jnp.max(jnp.abs(out - ref))
    )

    # Second shape: 3-D leading dims and ragged (non-tile-multiple) M/N to
    # exercise the masked edge handling (no wrapper-side M/N padding).
    x2 = jax.random.normal(kx, (2, 3, 48), dtype=jnp.float32)
    w2 = jax.random.normal(kw, (72, 48), dtype=jnp.float32)
    b2 = jax.random.normal(kb, (72,), dtype=jnp.float32)
    out2 = jax.block_until_ready(my_linear(x2, w2, b2))
    ref2 = x2 @ w2.T + b2
    assert out2.shape == (2, 3, 72), out2.shape
    assert jnp.allclose(out2, ref2, atol=1e-1, rtol=2e-2), float(
        jnp.max(jnp.abs(out2 - ref2))
    )

    print("KERNEL_OK")
</pallas_src>

<mosaic_0001>
module attributes {stable_mosaic.version = 11 : i64} {
  func.func @_linear_kernel_single(%arg0: i32, %arg1: i32, %arg2: memref<16x32xbf16, #tpu.memory_space<vmem>>, %arg3: memref<128x32xbf16, #tpu.memory_space<vmem>>, %arg4: memref<1x128xf32, #tpu.memory_space<vmem>>, %arg5: memref<16x128xf32, #tpu.memory_space<vmem>>) attributes {dimension_semantics = [#tpu.dimension_semantics<parallel>, #tpu.dimension_semantics<parallel>], iteration_bounds = array<i64: 1, 1>, scalar_prefetch = 0 : i64, scratch_operands = 0 : i64, tpu.core_type = #tpu.core_type<tc>, window_params = [{transform_indices = @transform_0, window_bounds = array<i64: 16, 32>}, {transform_indices = @transform_1, window_bounds = array<i64: 128, 32>}, {transform_indices = @transform_2, window_bounds = array<i64: 1, 128>}, {transform_indices = @transform_3, window_bounds = array<i64: 16, 128>}]} {
    %c0 = arith.constant 0 : index
    %c0_0 = arith.constant 0 : index
    %0 = vector.load %arg2[%c0, %c0_0] : memref<16x32xbf16, #tpu.memory_space<vmem>>, vector<16x32xbf16>
    %c0_1 = arith.constant 0 : index
    %c0_2 = arith.constant 0 : index
    %1 = vector.load %arg3[%c0_1, %c0_2] : memref<128x32xbf16, #tpu.memory_space<vmem>>, vector<128x32xbf16>
    %cst = arith.constant dense<0.000000e+00> : vector<16x128xf32>
    %2 = tpu.matmul %0, %1, %cst {dimension_numbers = #tpu.dot_dimension_numbers<[1], [1], [0], [0], [0, 0, 1, 0], [], []>} : vector<16x32xbf16>, vector<128x32xbf16>, vector<16x128xf32> -> vector<16x128xf32>
    %c0_3 = arith.constant 0 : index
    %c0_4 = arith.constant 0 : index
    %3 = vector.load %arg4[%c0_3, %c0_4] : memref<1x128xf32, #tpu.memory_space<vmem>>, vector<1x128xf32>
    %4 = vector.broadcast %3 : vector<1x128xf32> to vector<16x128xf32>
    %5 = arith.addf %2, %4 : vector<16x128xf32>
    %c0_5 = arith.constant 0 : index
    %c0_6 = arith.constant 0 : index
    %6 = vector.load %arg5[%c0_5, %c0_6] : memref<16x128xf32, #tpu.memory_space<vmem>>, vector<16x128xf32>
    tpu.vector_store %arg5[%c0_5, %c0_6], %5 {strides = array<i32>} : memref<16x128xf32, #tpu.memory_space<vmem>>, vector<16x128xf32>,
    return
  }
  func.func @transform_0(%arg0: i32, %arg1: i32) -> (i32, i32) {
    %c0_i32 = arith.constant 0 : i32
    %c0_i32_0 = arith.constant 0 : i32
    return %arg0, %c0_i32 : i32, i32
  }
  func.func @transform_1(%arg0: i32, %arg1: i32) -> (i32, i32) {
    %c0_i32 = arith.constant 0 : i32
    %c0_i32_0 = arith.constant 0 : i32
    return %arg1, %c0_i32 : i32, i32
  }
  func.func @transform_2(%arg0: i32, %arg1: i32) -> (i32, i32) {
    %c0_i32 = arith.constant 0 : i32
    %c0_i32_0 = arith.constant 0 : i32
    return %c0_i32, %arg1 : i32, i32
  }
  func.func @transform_3(%arg0: i32, %arg1: i32) -> (i32, i32) {
    %c0_i32 = arith.constant 0 : i32
    return %arg0, %arg1 : i32, i32
  }
}

</mosaic_0001>

<llo_original>
// kernel: my_linear.1
$region0: #{my_linear.1}
  #allocation0 [shape = 'u32[]', space=smem, size = 0x4, offset = 0x4, fixed_abs, tag = 'smem constant byte address 0x4 - core index']
  #allocation1 [shape = 'u32[72,128]{1,0:T(1,128)}', space=vmem, size = 0x9000, scoped, tag = 'internal scratch']
  %s0 = inlined_call_operand.vmem [shape: bf16[2,32], index: 0, kind: input, shape index: {}]
  %s1 = inlined_call_operand.vmem [shape: bf16[64,32], index: 1, kind: input, shape index: {}]
  %s2 = inlined_call_operand.vmem [shape: f32[1,64], index: 2, kind: input, shape index: {}]
  %s3 = inlined_call_operand.hbm [shape: f32[2,64], index: 3, kind: output, shape index: {}]
  %s4 = sld [smem:[#allocation0]]
  $region22: #{my_linear.1} parent=0
    _
  %s6 = ssub.s32 1, %s4
  %s7 = scalar_select 0, %s6, %s4
  $region1: #{my_linear.1} parent=0
    #allocation2 [shape = 'u8[8192]{0}', space=vmem, size = 0x2000, scoped, tag = 'output window, operand 0, single buffered']
    #allocation3 [shape = 's32[1]{0}', space=sflag, size = 0x4, scoped, tag = 'scoped memory for my_linear.1']
    %8 = vsyncpa [#allocation3], 0
    // Predicated region
    $region2: #{my_linear.1} parent=1 // pred_check
      _
    $region3: #{my_linear.1} parent=1 // pred_check_branch
      %10 = sbr.rel (0) target = $region5
    $region4: #{my_linear.1} parent=1 // pred_region
      _
    $region5: #{my_linear.1} parent=1 // pred_fallthru
      _
    // Predicated region
    $region6: #{my_linear.1} parent=1 // pred_check
      _
    $region7: #{my_linear.1} parent=1 // pred_check_branch
      %12 = sbr.rel (0) target = $region9
    $region8: #{my_linear.1} parent=1 // pred_region
      _
    $region9: #{my_linear.1} parent=1 // pred_fallthru
      _
    // Predicated region
    $region10: #{my_linear.1} parent=1 // pred_check
      _
    $region11: #{my_linear.1} parent=1 // pred_check_branch
      %14 = sbr.rel (0) target = $region13
    $region12: #{my_linear.1} parent=1 // pred_region
      _
    $region13: #{my_linear.1} parent=1 // pred_fallthru
      _
    %v15 = vld [vmem:[%s0] sm:$0x1]
    %v16 = vld [vmem:[%s0 + $0x1] sm:$0x1]
    %v17 = vld [vmem:[%s0 + $0x2] sm:$0x1]
    %v18 = vld [vmem:[%s0 + $0x3] sm:$0x1]
    %v19 = vld [vmem:[%s0 + $0x4] sm:$0x1]
    %v20 = vld [vmem:[%s0 + $0x5] sm:$0x1]
    %v21 = vld [vmem:[%s0 + $0x6] sm:$0x1]
    %v22 = vld [vmem:[%s0 + $0x7] sm:$0x1]
    %v23 = vld [vmem:[%s1] sm:$0xf]
    %v24 = vld [vmem:[%s1 + $0x4] sm:$0xf]
    %v25 = vld [vmem:[%s1 + $0x8] sm:$0xf]
    %v26 = vld [vmem:[%s1 + $0xc] sm:$0xf]
    %v27 = vld [vmem:[%s1 + $0x10] sm:$0xf]
    %v28 = vld [vmem:[%s1 + $0x14] sm:$0xf]
    %v29 = vld [vmem:[%s1 + $0x18] sm:$0xf]
    %v30 = vld [vmem:[%s1 + $0x1c] sm:$0xf]
    %v31 = vld [vmem:[%s1 + $0x20] sm:$0xf]
    %v32 = vld [vmem:[%s1 + $0x24] sm:$0xf]
    %v33 = vld [vmem:[%s1 + $0x28] sm:$0xf]
    %v34 = vld [vmem:[%s1 + $0x2c] sm:$0xf]
    %v35 = vld [vmem:[%s1 + $0x30] sm:$0xf]
    %v36 = vld [vmem:[%s1 + $0x34] sm:$0xf]
    %v37 = vld [vmem:[%s1 + $0x38] sm:$0xf]
    %v38 = vld [vmem:[%s1 + $0x3c] sm:$0xf]
    %v39 = vld [vmem:[%s2] sm:$0x1]
    %v41 = vperm.slane %v39, 0
    %44 = vst [vmem:[#allocation1] ss:$9 sm:$0xff] %v15
    %s46 = scalar_lea.vmem [#allocation1], 1
    %47 = vst [vmem:[%s46] ss:$9 sm:$0xff] %v16
    %s49 = scalar_lea.vmem [#allocation1], 2
    %50 = vst [vmem:[%s49] ss:$9 sm:$0xff] %v17
    %s52 = scalar_lea.vmem [#allocation1], 3
    %53 = vst [vmem:[%s52] ss:$9 sm:$0xff] %v18
    %s55 = scalar_lea.vmem [#allocation1], 4
    %56 = vst [vmem:[%s55] ss:$9 sm:$0xff] %v19
    %s58 = scalar_lea.vmem [#allocation1], 5
    %59 = vst [vmem:[%s58] ss:$9 sm:$0xff] %v20
    %s61 = scalar_lea.vmem [#allocation1], 6
    %62 = vst [vmem:[%s61] ss:$9 sm:$0xff] %v21
    %s64 = scalar_lea.vmem [#allocation1], 7
    %65 = vst [vmem:[%s64] ss:$9 sm:$0xff] %v22
    %v66 = vld [vmem:[#allocation1] sm:$0xff]
    %v83 = vunpack.c.l.b16 %v23
    %v84 = vunpack.c.l.b16 %v24
    %v85 = vunpack.c.l.b16 %v25
    %v86 = vunpack.c.l.b16 %v26
    %v87 = vunpack.c.l.b16 %v27
    %v88 = vunpack.c.l.b16 %v28
    %v89 = vunpack.c.l.b16 %v29
    %v90 = vunpack.c.l.b16 %v30
    %v91 = vunpack.c.l.b16 %v31
    %v92 = vunpack.c.l.b16 %v32
    %v93 = vunpack.c.l.b16 %v33
    %v94 = vunpack.c.l.b16 %v34
    %v95 = vunpack.c.l.b16 %v35
    %v96 = vunpack.c.l.b16 %v36
    %v97 = vunpack.c.l.b16 %v37
    %v98 = vunpack.c.l.b16 %v38
    %v99 = vpack.c.b16 %v84, %v83
    %v100 = vpack.c.b16 %v86, %v85
    %v101 = vpack.c.b16 %v88, %v87
    %v102 = vpack.c.b16 %v90, %v89
    %v103 = vpack.c.b16 %v92, %v91
    %v104 = vpack.c.b16 %v94, %v93
    %v105 = vpack.c.b16 %v96, %v95
    %v106 = vpack.c.b16 %v98, %v97
    %vm107 = vcmask 261120
    %v108 = vsel %vm107, %v66, 0
    %v111 = vsel %vm107, %v99, 0
    %v114 = vsel %vm107, %v100, 0
    %v117 = vsel %vm107, %v101, 0
    %v120 = vsel %vm107, %v102, 0
    %v123 = vsel %vm107, %v103, 0
    %v126 = vsel %vm107, %v104, 0
    %v129 = vsel %vm107, %v105, 0
    %v132 = vsel %vm107, %v106, 0
    %134 = vmatpush.bf16.xpose.msra.mxu0 %v132
    %135 = vmatpush.bf16.xpose.msra.mxu0 %v129
    %136 = vmatpush.bf16.xpose.msra.mxu0 %v126
    %137 = vmatpush.bf16.xpose.msra.mxu0 %v123
    %138 = vmatpush.bf16.xpose.msra.mxu0 %v120
    %139 = vmatpush.bf16.xpose.msra.mxu0 %v117
    %140 = vmatpush.bf16.xpose.msra.mxu0 %v114
    %141 = vmatpush.bf16.xpose.msra.mxu0 %v111
    %142 = vmatmul.bf16.gmra.mxu0 %v108
    %v143 = vpop.f32.mrf.mxu0
    %v144 = vadd.f32 %v41, %v143
    %v145 = vpop.f32.mrf.mxu0
    %v146 = vadd.f32 %v41, %v145
    %147 = vdwg.mxu0
    %148 = vst [vmem:[#allocation2] sm:$0xff] %v144
    %149 = vst [vmem:[#allocation2 + $0x8] sm:$0xff] %v146
    // Predicated region
    $region14: #{my_linear.1} parent=1 // pred_check
      _
    $region15: #{my_linear.1} parent=1 // pred_check_branch
      %151 = sbr.rel (0) target = $region17
    $region16: #{my_linear.1} parent=1 // pred_region
      %153 = vsyncadd [#allocation3], 224
      %s154 = sshll.u32 [#allocation2], 4
      %s155 = int_to_ptr.vmem [resolvable:$true] %s154
      %s156 = sshll.u32 %s3, 4
      %s157 = int_to_ptr.hbm [resolvable:$true] %s156
      %162 = dma.vmem_to_hbm [thread:$0]  %s155, 32, %s157, [#allocation3], 32, 32, 2
    $region17: #{my_linear.1} parent=1 // pred_fallthru
      _
    // Predicated region
    $region18: #{my_linear.1} parent=1 // pred_check
      _
    $region19: #{my_linear.1} parent=1 // pred_check_branch
      %164 = sbr.rel (0) target = $region21
    $region20: #{my_linear.1} parent=1 // pred_region
      %166 = dma.done [#allocation3], 256
    $region21: #{my_linear.1} parent=1 // pred_fallthru
      _
    %167 = vsyncpa [#allocation3], 1

</llo_original>
